<compile_context>
chip_gen: v5e
topology: v5e:2x2
jax: 0.10.0
libtpu: 0.0.40
codegen_flags: <defaults>
</compile_context>

<pallas_src>
import jax
import jax.numpy as jnp
from jax import lax
from jax.experimental import pallas as pl
from jax.experimental.pallas import tpu as pltpu

DIM_FC = 32                       # input feature dim of fc2 (dim_fc in the script)
HID1, HID2, HID3, OUT = 64, 32, 8, 1
MAX_TB = 8192                     # max rows per batch tile (multiple of 256)
SMALL_B = 1024                    # below this, one full-array block (no split)


def _round_up(x, m):
    return ((x + m - 1) // m) * m


def _mlp_kernel(y_ref,
                w1_ref, b1_ref,
                w2_ref, b2_ref,
                w3_ref, b3_ref,
                w4_ref, b4_ref,
                o_ref):
    """Fused 4-layer MLP on one batch tile.

    y_ref : (TB, DIM_FC)   batch on sublanes, features on lanes (HBM layout)
    w1..w3: PyTorch layout (out_features, in_features), f32
    w4    : (in_features, out_features) = (8, 1)  (column layout, VPU path)
    b*    : (out_features, 1)
    o_ref : (1, TB)        batch on lanes -> lane-dense output stores
    """
    x16 = y_ref[...].astype(jnp.bfloat16)                       # (TB, 32)

    # Layer 1: contract the feature axes of W1 (64,32) and x (TB,32) directly
    # (A @ B^T form; same dot_general orientation as q @ k^T in flash attention),
    # so activations come out with batch on lanes: (64, TB).  f32 accumulate.
    h = lax.dot_general(w1_ref[...].astype(jnp.bfloat16), x16,
                        dimension_numbers=(((1,), (1,)), ((), ())),
                        preferred_element_type=jnp.float32)
    h = jnp.maximum(h + b1_ref[...], 0.0)
    # Dropout(0.1): identity at inference time.

    # Layer 2: (32, 64) @ (64, TB) -> (32, TB)
    h = lax.dot_general(w2_ref[...].astype(jnp.bfloat16), h.astype(jnp.bfloat16),
                        dimension_numbers=(((1,), (0,)), ((), ())),
                        preferred_element_type=jnp.float32)
    h = jnp.maximum(h + b2_ref[...], 0.0)

    # Layer 3: (8, 32) @ (32, TB) -> (8, TB)
    h = lax.dot_general(w3_ref[...].astype(jnp.bfloat16), h.astype(jnp.bfloat16),
                        dimension_numbers=(((1,), (0,)), ((), ())),
                        preferred_element_type=jnp.float32)
    h = jnp.maximum(h + b3_ref[...], 0.0)

    # Layer 4 (8 -> 1): f32 VPU multiply + sublane reduction (no MXU pass with a
    # single output column).  Result is (1, TB): lane-dense.
    out = jnp.sum(h * w4_ref[...], axis=0, keepdims=True) + b4_ref[...]
    o_ref[...] = out.astype(o_ref.dtype)


def deepseq_cnn_forward(y, params):
    """Run the fc2 head on y of shape (B, DIM_FC).  Returns (B, 1) float32."""
    (w1, b1), (w2, b2), (w3, b3), (w4, b4) = params
    B = y.shape[0]

    # Tile selection (no host-side padding):
    #  * B <= SMALL_B: one block equal to the full arrays (any B is legal when
    #    block_shape == array shape), grid of 1.
    #  * Otherwise: at least 2 blocks so the parallel axis shards across both
    #    TensorCores on v7x; tile rounded to a multiple of 256 (output lane dim
    #    divisible by 128, input sublane dim divisible by 8) and capped at
    #    MAX_TB so the VMEM footprint fits every generation's scoped default.
    #    The tail block may be partial: Pallas masks its output store.
    if B <= SMALL_B:
        tb = B
    else:
        tb = min(MAX_TB, _round_up(pl.cdiv(B, 2), 256))
    grid = (pl.cdiv(B, tb),)

    y_spec = pl.BlockSpec((tb, DIM_FC), lambda i: (i, 0))
    # Output laid out with batch on the lane axis: array (1, B), block (1, tb).
    o_spec = pl.BlockSpec((1, tb), lambda i: (0, i))

    # Weights/biases: full arrays with constant block indices -> DMA'd on the
    # first grid step only.
    def rep(arr):
        return pl.BlockSpec(arr.shape, lambda i: (0, 0))

    in_specs = [
        y_spec,
        rep(w1), rep(b1),
        rep(w2), rep(b2),
        rep(w3), rep(b3),
        rep(w4), rep(b4),
    ]

    param_bytes = sum(int(a.size) * 4 for p in params for a in p)
    cost = pl.CostEstimate(
        flops=2 * B * (DIM_FC * HID1 + HID1 * HID2 + HID2 * HID3 + HID3 * OUT),
        transcendentals=0,
        bytes_accessed=4 * B * (DIM_FC + OUT) + param_bytes,
    )

    out = pl.pallas_call(
        _mlp_kernel,
        out_shape=jax.ShapeDtypeStruct((1, B), jnp.float32),
        grid_spec=pltpu.PrefetchScalarGridSpec(
            num_scalar_prefetch=0,
            grid=grid,
            in_specs=in_specs,
            out_specs=o_spec,
        ),
        compiler_params=pltpu.CompilerParams(
            dimension_semantics=("parallel",)),
        cost_estimate=cost,
    )(y, w1, b1, w2, b2, w3, b3, w4, b4)

    # (1, B) lane-major -> (B, 1) to match the PyTorch module's output shape.
    return out[0, :].reshape(B, 1)


def init_params(key):
    """PyTorch-style Linear init: U(-1/sqrt(fan_in), 1/sqrt(fan_in)).

    w1..w3 stored in PyTorch layout (out_features, in_features); the last-layer
    weight w4 is stored as (in_features, out_features) = (8, 1) for the in-kernel
    VPU reduction.  Biases stored as (out_features, 1).
    """
    dims = [(DIM_FC, HID1), (HID1, HID2), (HID2, HID3), (HID3, OUT)]
    params = []
    for li, (fan_in, fan_out) in enumerate(dims):
        key, kw, kb = jax.random.split(key, 3)
        bound = 1.0 / jnp.sqrt(float(fan_in))
        if li < len(dims) - 1:
            w = jax.random.uniform(kw, (fan_out, fan_in), jnp.float32, -bound, bound)
        else:
            w = jax.random.uniform(kw, (fan_in, fan_out), jnp.float32, -bound, bound)
        b = jax.random.uniform(kb, (fan_out, 1), jnp.float32, -bound, bound)
        params.append((w, b))
    return params


def reference_forward(y, params):
    """Pure-JAX f32 reference of the same forward pass (for a sanity check)."""
    (w1, b1), (w2, b2), (w3, b3), (w4, b4) = params
    h = jnp.maximum(y @ w1.T + b1.T, 0.0)
    h = jnp.maximum(h @ w2.T + b2.T, 0.0)
    h = jnp.maximum(h @ w3.T + b3.T, 0.0)
    return h @ w4 + b4.T


if __name__ == "__main__":
    key = jax.random.PRNGKey(0)
    key, kx, kx2 = jax.random.split(key, 3)
    params = init_params(key)

    # Tolerances are loosened vs. a pure-f32 reference because layers 1-3 use
    # bf16 MXU operands (f32 accumulation) inside the kernel.
    ATOL = RTOL = 3e-2

    # Small deterministic test (single full-array block, grid of 1).
    B = 2
    y = jax.random.normal(kx, (B, DIM_FC), jnp.float32)
    out = jax.block_until_ready(deepseq_cnn_forward(y, params))
    ref = reference_forward(y, params)
    assert out.shape == (B, OUT), out.shape
    assert jnp.allclose(out, ref, atol=ATOL, rtol=RTOL), (out, ref)

    # Secondary check exercising the multi-block path with a partial tail block
    # (B = 2600 -> tb = 1408, grid = 2, last block masked past row 2599).
    B2 = 2600
    y2 = jax.random.normal(kx2, (B2, DIM_FC), jnp.float32)
    out2 = jax.block_until_ready(deepseq_cnn_forward(y2, params))
    ref2 = reference_forward(y2, params)
    assert out2.shape == (B2, OUT), out2.shape
    assert jnp.allclose(out2, ref2, atol=ATOL, rtol=RTOL), float(
        jnp.max(jnp.abs(out2 - ref2)))

    print("KERNEL_OK")
</pallas_src>

<mosaic_0001>
module attributes {stable_mosaic.version = 11 : i64} {
  func.func @_mlp_kernel(%arg0: i32, %arg1: memref<2x32xf32, #tpu.memory_space<vmem>>, %arg2: memref<64x32xf32, #tpu.memory_space<vmem>>, %arg3: memref<64x1xf32, #tpu.memory_space<vmem>>, %arg4: memref<32x64xf32, #tpu.memory_space<vmem>>, %arg5: memref<32x1xf32, #tpu.memory_space<vmem>>, %arg6: memref<8x32xf32, #tpu.memory_space<vmem>>, %arg7: memref<8x1xf32, #tpu.memory_space<vmem>>, %arg8: memref<8x1xf32, #tpu.memory_space<vmem>>, %arg9: memref<1x1xf32, #tpu.memory_space<vmem>>, %arg10: memref<1x2xf32, #tpu.memory_space<vmem>>) attributes {dimension_semantics = [#tpu.dimension_semantics<parallel>], iteration_bounds = array<i64: 1>, scalar_prefetch = 0 : i64, scratch_operands = 0 : i64, tpu.core_type = #tpu.core_type<tc>, window_params = [{transform_indices = @transform_0, window_bounds = array<i64: 2, 32>}, {pipeline_mode = #tpu.pipeline_mode<synchronous>, transform_indices = @transform_1, window_bounds = array<i64: 64, 32>}, {pipeline_mode = #tpu.pipeline_mode<synchronous>, transform_indices = @transform_2, window_bounds = array<i64: 64, 1>}, {pipeline_mode = #tpu.pipeline_mode<synchronous>, transform_indices = @transform_3, window_bounds = array<i64: 32, 64>}, {pipeline_mode = #tpu.pipeline_mode<synchronous>, transform_indices = @transform_4, window_bounds = array<i64: 32, 1>}, {pipeline_mode = #tpu.pipeline_mode<synchronous>, transform_indices = @transform_5, window_bounds = array<i64: 8, 32>}, {pipeline_mode = #tpu.pipeline_mode<synchronous>, transform_indices = @transform_6, window_bounds = array<i64: 8, 1>}, {pipeline_mode = #tpu.pipeline_mode<synchronous>, transform_indices = @transform_7, window_bounds = array<i64: 8, 1>}, {pipeline_mode = #tpu.pipeline_mode<synchronous>, transform_indices = @transform_8, window_bounds = array<i64: 1, 1>}, {transform_indices = @transform_9, window_bounds = array<i64: 1, 2>}]} {
    %c0 = arith.constant 0 : index
    %c0_0 = arith.constant 0 : index
    %0 = vector.load %arg1[%c0, %c0_0] : memref<2x32xf32, #tpu.memory_space<vmem>>, vector<2x32xf32>
    %1 = arith.truncf %0 : vector<2x32xf32> to vector<2x32xbf16>
    %c0_1 = arith.constant 0 : index
    %c0_2 = arith.constant 0 : index
    %2 = vector.load %arg2[%c0_1, %c0_2] : memref<64x32xf32, #tpu.memory_space<vmem>>, vector<64x32xf32>
    %3 = arith.truncf %2 : vector<64x32xf32> to vector<64x32xbf16>
    %cst = arith.constant dense<0.000000e+00> : vector<64x2xf32>
    %4 = tpu.matmul %3, %1, %cst {dimension_numbers = #tpu.dot_dimension_numbers<[1], [1], [0], [0], [0, 0, 1, 0], [], []>} : vector<64x32xbf16>, vector<2x32xbf16>, vector<64x2xf32> -> vector<64x2xf32>
    %c0_3 = arith.constant 0 : index
    %c0_4 = arith.constant 0 : index
    %5 = vector.load %arg3[%c0_3, %c0_4] : memref<64x1xf32, #tpu.memory_space<vmem>>, vector<64x1xf32>
    %6 = vector.broadcast %5 : vector<64x1xf32> to vector<64x2xf32>
    %7 = arith.addf %4, %6 : vector<64x2xf32>
    %cst_5 = arith.constant 0.000000e+00 : f32
    %8 = vector.broadcast %cst_5 : f32 to vector<64x2xf32>
    %9 = arith.maximumf %7, %8 : vector<64x2xf32>
    %c0_6 = arith.constant 0 : index
    %c0_7 = arith.constant 0 : index
    %10 = vector.load %arg4[%c0_6, %c0_7] : memref<32x64xf32, #tpu.memory_space<vmem>>, vector<32x64xf32>
    %11 = arith.truncf %10 : vector<32x64xf32> to vector<32x64xbf16>
    %12 = arith.truncf %9 : vector<64x2xf32> to vector<64x2xbf16>
    %cst_8 = arith.constant dense<0.000000e+00> : vector<32x2xf32>
    %13 = tpu.matmul %11, %12, %cst_8 {dimension_numbers = #tpu.dot_dimension_numbers<[1], [0], [0], [1], [0, 0, 1, 1], [], []>} : vector<32x64xbf16>, vector<64x2xbf16>, vector<32x2xf32> -> vector<32x2xf32>
    %c0_9 = arith.constant 0 : index
    %c0_10 = arith.constant 0 : index
    %14 = vector.load %arg5[%c0_9, %c0_10] : memref<32x1xf32, #tpu.memory_space<vmem>>, vector<32x1xf32>
    %15 = vector.broadcast %14 : vector<32x1xf32> to vector<32x2xf32>
    %16 = arith.addf %13, %15 : vector<32x2xf32>
    %cst_11 = arith.constant 0.000000e+00 : f32
    %17 = vector.broadcast %cst_11 : f32 to vector<32x2xf32>
    %18 = arith.maximumf %16, %17 : vector<32x2xf32>
    %c0_12 = arith.constant 0 : index
    %c0_13 = arith.constant 0 : index
    %19 = vector.load %arg6[%c0_12, %c0_13] : memref<8x32xf32, #tpu.memory_space<vmem>>, vector<8x32xf32>
    %20 = arith.truncf %19 : vector<8x32xf32> to vector<8x32xbf16>
    %21 = arith.truncf %18 : vector<32x2xf32> to vector<32x2xbf16>
    %cst_14 = arith.constant dense<0.000000e+00> : vector<8x2xf32>
    %22 = tpu.matmul %20, %21, %cst_14 {dimension_numbers = #tpu.dot_dimension_numbers<[1], [0], [0], [1], [0, 0, 1, 1], [], []>} : vector<8x32xbf16>, vector<32x2xbf16>, vector<8x2xf32> -> vector<8x2xf32>
    %c0_15 = arith.constant 0 : index
    %c0_16 = arith.constant 0 : index
    %23 = vector.load %arg7[%c0_15, %c0_16] : memref<8x1xf32, #tpu.memory_space<vmem>>, vector<8x1xf32>
    %24 = vector.broadcast %23 : vector<8x1xf32> to vector<8x2xf32>
    %25 = arith.addf %22, %24 : vector<8x2xf32>
    %cst_17 = arith.constant 0.000000e+00 : f32
    %26 = vector.broadcast %cst_17 : f32 to vector<8x2xf32>
    %27 = arith.maximumf %25, %26 : vector<8x2xf32>
    %c0_18 = arith.constant 0 : index
    %c0_19 = arith.constant 0 : index
    %28 = vector.load %arg8[%c0_18, %c0_19] : memref<8x1xf32, #tpu.memory_space<vmem>>, vector<8x1xf32>
    %29 = vector.broadcast %28 : vector<8x1xf32> to vector<8x2xf32>
    %30 = arith.mulf %27, %29 : vector<8x2xf32>
    %cst_20 = arith.constant dense<0.000000e+00> : vector<2xf32>
    %31 = vector.multi_reduction <add>, %30, %cst_20 [0] : vector<8x2xf32> to vector<2xf32>
    %32 = vector.shape_cast %31 : vector<2xf32> to vector<1x2xf32>
    %c0_21 = arith.constant 0 : index
    %c0_22 = arith.constant 0 : index
    %33 = vector.load %arg9[%c0_21, %c0_22] : memref<1x1xf32, #tpu.memory_space<vmem>>, vector<1x1xf32>
    %34 = vector.broadcast %33 : vector<1x1xf32> to vector<1x2xf32>
    %35 = arith.addf %32, %34 : vector<1x2xf32>
    %c0_23 = arith.constant 0 : index
    %c0_24 = arith.constant 0 : index
    %36 = vector.load %arg10[%c0_23, %c0_24] : memref<1x2xf32, #tpu.memory_space<vmem>>, vector<1x2xf32>
    tpu.vector_store %arg10[%c0_23, %c0_24], %35 {strides = array<i32>} : memref<1x2xf32, #tpu.memory_space<vmem>>, vector<1x2xf32>,
    return
  }
  func.func @transform_0(%arg0: i32) -> (i32, i32) {
    %c0_i32 = arith.constant 0 : i32
    %c0_i32_0 = arith.constant 0 : i32
    return %arg0, %c0_i32 : i32, i32
  }
  func.func @transform_1(%arg0: i32) -> (i32, i32) {
    %c0_i32 = arith.constant 0 : i32
    %c0_i32_0 = arith.constant 0 : i32
    %c0_i32_1 = arith.constant 0 : i32
    return %c0_i32, %c0_i32_0 : i32, i32
  }
  func.func @transform_2(%arg0: i32) -> (i32, i32) {
    %c0_i32 = arith.constant 0 : i32
    %c0_i32_0 = arith.constant 0 : i32
    %c0_i32_1 = arith.constant 0 : i32
    return %c0_i32, %c0_i32_0 : i32, i32
  }
  func.func @transform_3(%arg0: i32) -> (i32, i32) {
    %c0_i32 = arith.constant 0 : i32
    %c0_i32_0 = arith.constant 0 : i32
    %c0_i32_1 = arith.constant 0 : i32
    return %c0_i32, %c0_i32_0 : i32, i32
  }
  func.func @transform_4(%arg0: i32) -> (i32, i32) {
    %c0_i32 = arith.constant 0 : i32
    %c0_i32_0 = arith.constant 0 : i32
    %c0_i32_1 = arith.constant 0 : i32
    return %c0_i32, %c0_i32_0 : i32, i32
  }
  func.func @transform_5(%arg0: i32) -> (i32, i32) {
    %c0_i32 = arith.constant 0 : i32
    %c0_i32_0 = arith.constant 0 : i32
    %c0_i32_1 = arith.constant 0 : i32
    return %c0_i32, %c0_i32_0 : i32, i32
  }
  func.func @transform_6(%arg0: i32) -> (i32, i32) {
    %c0_i32 = arith.constant 0 : i32
    %c0_i32_0 = arith.constant 0 : i32
    %c0_i32_1 = arith.constant 0 : i32
    return %c0_i32, %c0_i32_0 : i32, i32
  }
  func.func @transform_7(%arg0: i32) -> (i32, i32) {
    %c0_i32 = arith.constant 0 : i32
    %c0_i32_0 = arith.constant 0 : i32
    %c0_i32_1 = arith.constant 0 : i32
    return %c0_i32, %c0_i32_0 : i32, i32
  }
  func.func @transform_8(%arg0: i32) -> (i32, i32) {
    %c0_i32 = arith.constant 0 : i32
    %c0_i32_0 = arith.constant 0 : i32
    %c0_i32_1 = arith.constant 0 : i32
    return %c0_i32, %c0_i32_0 : i32, i32
  }
  func.func @transform_9(%arg0: i32) -> (i32, i32) {
    %c0_i32 = arith.constant 0 : i32
    %c0_i32_0 = arith.constant 0 : i32
    return %c0_i32, %arg0 : i32, i32
  }
}

</mosaic_0001>

<llo_original>
// kernel: tpu_custom_call.1
$region0: #{tpu_custom_call.1}
  #allocation0 [shape = 'u32[]', space=smem, size = 0x4, offset = 0x4, fixed_abs, tag = 'smem constant byte address 0x4 - core index']
  #allocation1 [shape = 'u32[72,128]{1,0:T(1,128)}', space=vmem, size = 0x9000, scoped, tag = 'internal scratch']
  #allocation2 [shape = 'f32[1,1]{1,0:T(1,128)S(1)}', space=vmem, size = 0x200, scoped, tag = 'scoped memory for tpu_custom_call.1']
  %s0 = inlined_call_operand.vmem [shape: f32[2,32], index: 0, kind: input, shape index: {}]
  %s1 = inlined_call_operand.vmem [shape: f32[64,32], index: 1, kind: input, shape index: {}]
  %s2 = inlined_call_operand.vmem [shape: f32[64,1], index: 2, kind: input, shape index: {}]
  %s3 = inlined_call_operand.vmem [shape: f32[32,64], index: 3, kind: input, shape index: {}]
  %s4 = inlined_call_operand.vmem [shape: f32[32,1], index: 4, kind: input, shape index: {}]
  %s5 = inlined_call_operand.vmem [shape: f32[8,32], index: 5, kind: input, shape index: {}]
  %s6 = inlined_call_operand.vmem [shape: f32[8,1], index: 6, kind: input, shape index: {}]
  %s7 = inlined_call_operand.vmem [shape: f32[8,1], index: 7, kind: input, shape index: {}]
  %s8 = inlined_call_operand.<no memory space> [shape: f32[1,1], index: 8, kind: input, shape index: {}]
  %s9 = inlined_call_operand.hbm [shape: f32[1,2], index: 9, kind: output, shape index: {}]
  %s10 = sld [smem:[#allocation0]]
  $region46: #{tpu_custom_call.1} parent=0
    _
  %s12 = ssub.s32 1, %s10
  %s13 = scalar_select 0, %s12, %s10
  %v14 = vstv %s8
  %15 = vst [vmem:[#allocation2] sm:$0x1] %v14
  $region1: #{tpu_custom_call.1} parent=0
    #allocation3 [shape = 'u8[512]{0}', space=vmem, size = 0x400, scoped, tag = 'output window, operand 0, single buffered']
    #allocation4 [shape = 's32[1]{0}', space=sflag, size = 0x4, scoped, tag = 'scoped memory for tpu_custom_call.1']
    %16 = vsyncpa [#allocation4], 0
    // Predicated region
    $region2: #{tpu_custom_call.1} parent=1 // pred_check
      _
    $region3: #{tpu_custom_call.1} parent=1 // pred_check_branch
      %18 = sbr.rel (0) target = $region5
    $region4: #{tpu_custom_call.1} parent=1 // pred_region
      _
    $region5: #{tpu_custom_call.1} parent=1 // pred_fallthru
      _
    // Predicated region
    $region6: #{tpu_custom_call.1} parent=1 // pred_check
      _
    $region7: #{tpu_custom_call.1} parent=1 // pred_check_branch
      %20 = sbr.rel (0) target = $region9
    $region8: #{tpu_custom_call.1} parent=1 // pred_region
      _
    $region9: #{tpu_custom_call.1} parent=1 // pred_fallthru
      _
    // Predicated region
    $region10: #{tpu_custom_call.1} parent=1 // pred_check
      _
    $region11: #{tpu_custom_call.1} parent=1 // pred_check_branch
      %22 = sbr.rel (0) target = $region13
    $region12: #{tpu_custom_call.1} parent=1 // pred_region
      _
    $region13: #{tpu_custom_call.1} parent=1 // pred_fallthru
      _
    // Predicated region
    $region14: #{tpu_custom_call.1} parent=1 // pred_check
      _
    $region15: #{tpu_custom_call.1} parent=1 // pred_check_branch
      %24 = sbr.rel (0) target = $region17
    $region16: #{tpu_custom_call.1} parent=1 // pred_region
      _
    $region17: #{tpu_custom_call.1} parent=1 // pred_fallthru
      _
    // Predicated region
    $region18: #{tpu_custom_call.1} parent=1 // pred_check
      _
    $region19: #{tpu_custom_call.1} parent=1 // pred_check_branch
      %26 = sbr.rel (0) target = $region21
    $region20: #{tpu_custom_call.1} parent=1 // pred_region
      _
    $region21: #{tpu_custom_call.1} parent=1 // pred_fallthru
      _
    // Predicated region
    $region22: #{tpu_custom_call.1} parent=1 // pred_check
      _
    $region23: #{tpu_custom_call.1} parent=1 // pred_check_branch
      %28 = sbr.rel (0) target = $region25
    $region24: #{tpu_custom_call.1} parent=1 // pred_region
      _
    $region25: #{tpu_custom_call.1} parent=1 // pred_fallthru
      _
    // Predicated region
    $region26: #{tpu_custom_call.1} parent=1 // pred_check
      _
    $region27: #{tpu_custom_call.1} parent=1 // pred_check_branch
      %30 = sbr.rel (0) target = $region29
    $region28: #{tpu_custom_call.1} parent=1 // pred_region
      _
    $region29: #{tpu_custom_call.1} parent=1 // pred_fallthru
      _
    // Predicated region
    $region30: #{tpu_custom_call.1} parent=1 // pred_check
      _
    $region31: #{tpu_custom_call.1} parent=1 // pred_check_branch
      %32 = sbr.rel (0) target = $region33
    $region32: #{tpu_custom_call.1} parent=1 // pred_region
      _
    $region33: #{tpu_custom_call.1} parent=1 // pred_fallthru
      _
    // Predicated region
    $region34: #{tpu_custom_call.1} parent=1 // pred_check
      _
    $region35: #{tpu_custom_call.1} parent=1 // pred_check_branch
      %34 = sbr.rel (0) target = $region37
    $region36: #{tpu_custom_call.1} parent=1 // pred_region
      _
    $region37: #{tpu_custom_call.1} parent=1 // pred_fallthru
      _
    %v36 = vld [vmem:[%s0] sm:$0x3]
    %v37 = vpack.c.bf16 %v36, %v36
    %v38 = vld [vmem:[%s1] sm:$0xff]
    %v39 = vld [vmem:[%s1 + $0x8] sm:$0xff]
    %v40 = vld [vmem:[%s1 + $0x10] sm:$0xff]
    %v41 = vld [vmem:[%s1 + $0x18] sm:$0xff]
    %v42 = vld [vmem:[%s1 + $0x20] sm:$0xff]
    %v43 = vld [vmem:[%s1 + $0x28] sm:$0xff]
    %v44 = vld [vmem:[%s1 + $0x30] sm:$0xff]
    %v45 = vld [vmem:[%s1 + $0x38] sm:$0xff]
    %v46 = vpack.c.bf16 %v39, %v38
    %v47 = vpack.c.bf16 %v41, %v40
    %v48 = vpack.c.bf16 %v43, %v42
    %v49 = vpack.c.bf16 %v45, %v44
    %v50 = vld [vmem:[%s2] sm:$0xff]
    %v51 = vld [vmem:[%s2 + $0x8] sm:$0xff]
    %v52 = vld [vmem:[%s2 + $0x10] sm:$0xff]
    %v53 = vld [vmem:[%s2 + $0x18] sm:$0xff]
    %v54 = vld [vmem:[%s2 + $0x20] sm:$0xff]
    %v55 = vld [vmem:[%s2 + $0x28] sm:$0xff]
    %v56 = vld [vmem:[%s2 + $0x30] sm:$0xff]
    %v57 = vld [vmem:[%s2 + $0x38] sm:$0xff]
    %59 = vset.pattern.permute.xlu0 0
    %60 = vperm.xlu0 %59, %v50
    %v61 = vpop.permute.xlu0 %60
    %64 = vset.pattern.permute.xlu0 0
    %65 = vperm.xlu0 %64, %v51
    %v66 = vpop.permute.xlu0 %65
    %69 = vset.pattern.permute.xlu0 0
    %70 = vperm.xlu0 %69, %v52
    %v71 = vpop.permute.xlu0 %70
    %74 = vset.pattern.permute.xlu0 0
    %75 = vperm.xlu0 %74, %v53
    %v76 = vpop.permute.xlu0 %75
    %79 = vset.pattern.permute.xlu0 0
    %80 = vperm.xlu0 %79, %v54
    %v81 = vpop.permute.xlu0 %80
    %84 = vset.pattern.permute.xlu0 0
    %85 = vperm.xlu0 %84, %v55
    %v86 = vpop.permute.xlu0 %85
    %89 = vset.pattern.permute.xlu0 0
    %90 = vperm.xlu0 %89, %v56
    %v91 = vpop.permute.xlu0 %90
    %94 = vset.pattern.permute.xlu0 0
    %95 = vperm.xlu0 %94, %v57
    %v96 = vpop.permute.xlu0 %95
    %vm98 = vcmask 261120
    %v100 = vsel %vm98, %v46, 0
    %v103 = vsel %vm98, %v47, 0
    %v106 = vsel %vm98, %v48, 0
    %v109 = vsel %vm98, %v49, 0
    %v112 = vsel %vm98, %v37, 0
    %114 = vmatpush.bf16.xpose.msra.mxu0 0
    %115 = vmatpush.bf16.xpose.msra.mxu0 0
    %116 = vmatpush.bf16.xpose.msra.mxu0 0
    %117 = vmatpush.bf16.xpose.msra.mxu0 0
    %118 = vmatpush.bf16.xpose.msra.mxu0 0
    %119 = vmatpush.bf16.xpose.msra.mxu0 0
    %120 = vmatpush.bf16.xpose.msra.mxu0 0
    %121 = vmatpush.bf16.xpose.msra.mxu0 %v112
    %122 = vmatmul.bf16.gmra.mxu0 %v100
    %v123 = vpop.f32.mrf.mxu0
    %v124 = vadd.f32 %v61, %v123
    %v125 = vpop.f32.mrf.mxu0
    %v126 = vadd.f32 %v66, %v125
    %127 = vmatmul.bf16.gmra.mxu0 %v103
    %v128 = vpop.f32.mrf.mxu0
    %v129 = vadd.f32 %v71, %v128
    %v130 = vpop.f32.mrf.mxu0
    %v131 = vadd.f32 %v76, %v130
    %132 = vmatmul.bf16.gmra.mxu0 %v106
    %v133 = vpop.f32.mrf.mxu0
    %v134 = vadd.f32 %v81, %v133
    %v135 = vpop.f32.mrf.mxu0
    %v136 = vadd.f32 %v86, %v135
    %137 = vmatmul.bf16.gmra.mxu0 %v109
    %v138 = vpop.f32.mrf.mxu0
    %v139 = vadd.f32 %v91, %v138
    %v140 = vpop.f32.mrf.mxu0
    %v141 = vadd.f32 %v96, %v140
    %142 = vdwg.mxu0
    %v143 = vmax.f32 %v124, 0.0
    %v144 = vmax.f32 %v126, 0.0
    %v145 = vmax.f32 %v129, 0.0
    %v146 = vmax.f32 %v131, 0.0
    %v147 = vmax.f32 %v134, 0.0
    %v148 = vmax.f32 %v136, 0.0
    %v149 = vmax.f32 %v139, 0.0
    %v150 = vmax.f32 %v141, 0.0
    %v151 = vld [vmem:[%s3] sm:$0xff]
    %v152 = vld [vmem:[%s3 + $0x8] sm:$0xff]
    %v153 = vld [vmem:[%s3 + $0x10] sm:$0xff]
    %v154 = vld [vmem:[%s3 + $0x18] sm:$0xff]
    %v155 = vpack.c.bf16 %v152, %v151
    %v156 = vpack.c.bf16 %v154, %v153
    %v157 = vpack.c.bf16 %v144, %v143
    %v158 = vpack.c.bf16 %v146, %v145
    %v159 = vpack.c.bf16 %v148, %v147
    %v160 = vpack.c.bf16 %v150, %v149
    %v161 = vld [vmem:[%s4] sm:$0xff]
    %v162 = vld [vmem:[%s4 + $0x8] sm:$0xff]
    %v163 = vld [vmem:[%s4 + $0x10] sm:$0xff]
    %v164 = vld [vmem:[%s4 + $0x18] sm:$0xff]
    %166 = vset.pattern.permute.xlu0 0
    %167 = vperm.xlu0 %166, %v161
    %v168 = vpop.permute.xlu0 %167
    %171 = vset.pattern.permute.xlu0 0
    %172 = vperm.xlu0 %171, %v162
    %v173 = vpop.permute.xlu0 %172
    %176 = vset.pattern.permute.xlu0 0
    %177 = vperm.xlu0 %176, %v163
    %v178 = vpop.permute.xlu0 %177
    %181 = vset.pattern.permute.xlu0 0
    %182 = vperm.xlu0 %181, %v164
    %v183 = vpop.permute.xlu0 %182
    %vm185 = vcmask 523264
    %v187 = vsel %vm185, %v155, 0
    %v190 = vsel %vm185, %v156, 0
    %192 = vmatpush.bf16.msra.mxu0 0
    %193 = vmatpush.bf16.msra.mxu0 0
    %194 = vmatpush.bf16.msra.mxu0 0
    %195 = vmatpush.bf16.msra.mxu0 0
    %196 = vmatpush.bf16.msra.mxu0 %v160
    %197 = vmatpush.bf16.msra.mxu0 %v159
    %198 = vmatpush.bf16.msra.mxu0 %v158
    %199 = vmatpush.bf16.msra.mxu0 %v157
    %200 = vmatmul.bf16.gmra.mxu0 %v187
    %v201 = vpop.f32.mrf.mxu0
    %v202 = vadd.f32 %v168, %v201
    %v203 = vpop.f32.mrf.mxu0
    %v204 = vadd.f32 %v173, %v203
    %205 = vmatmul.bf16.gmra.mxu0 %v190
    %v206 = vpop.f32.mrf.mxu0
    %v207 = vadd.f32 %v178, %v206
    %v208 = vpop.f32.mrf.mxu0
    %v209 = vadd.f32 %v183, %v208
    %210 = vdwg.mxu0
    %v211 = vmax.f32 %v202, 0.0
    %v212 = vmax.f32 %v204, 0.0
    %v213 = vmax.f32 %v207, 0.0
    %v214 = vmax.f32 %v209, 0.0
    %v215 = vld [vmem:[%s5] sm:$0xff]
    %v216 = vpack.c.bf16 %v215, %v215
    %v217 = vpack.c.bf16 %v212, %v211
    %v218 = vpack.c.bf16 %v214, %v213
    %v219 = vld [vmem:[%s6] sm:$0xff]
    %221 = vset.pattern.permute.xlu0 0
    %222 = vperm.xlu0 %221, %v219
    %v223 = vpop.permute.xlu0 %222
    %v226 = vsel %vm98, %v216, 0
    %228 = vmatpush.bf16.msra.mxu0 0
    %229 = vmatpush.bf16.msra.mxu0 0
    %230 = vmatpush.bf16.msra.mxu0 0
    %231 = vmatpush.bf16.msra.mxu0 0
    %232 = vmatpush.bf16.msra.mxu0 0
    %233 = vmatpush.bf16.msra.mxu0 0
    %234 = vmatpush.bf16.msra.mxu0 %v218
    %235 = vmatpush.bf16.msra.mxu0 %v217
    %236 = vmatmul.bf16.gmra.mxu0 %v226
    %v237 = vpop.f32.mrf.mxu0
    %v238 = vadd.f32 %v223, %v237
    %v239 = vpop.f32.mrf.mxu0
    %240 = vdwg.mxu0
    %v241 = vmax.f32 %v238, 0.0
    %v242 = vld [vmem:[%s7] sm:$0xff]
    %244 = vset.pattern.permute.xlu0 0
    %245 = vperm.xlu0 %244, %v242
    %v246 = vpop.permute.xlu0 %245
    %v248 = vmul.f32 %v241, %v246
    %vm249 = vcmask 15360
    %v250 = vsel %vm249, %v248, 0.0
    %v251 = vrot.slane %v250, 4
    %v252 = vadd.f32 %v250, %v251
    %v253 = vrot.slane %v252, 2
    %v254 = vadd.f32 %v252, %v253
    %v255 = vrot.slane %v254, 1
    %v256 = vadd.f32 %v254, %v255
    %v257 = vld [vmem:[#allocation2] sm:$0x1]
    %259 = vset.pattern.permute.xlu0 0
    %260 = vperm.xlu0 %259, %v257
    %v261 = vpop.permute.xlu0 %260
    %v263 = vperm.slane %v261, 0
    %v264 = vadd.f32 %v256, %v263
    %vm265 = vcmask 8192
    %266 = vst.msk [vmem:[#allocation3] sm:$0x1] %vm265, %v264
    // Predicated region
    $region38: #{tpu_custom_call.1} parent=1 // pred_check
      _
    $region39: #{tpu_custom_call.1} parent=1 // pred_check_branch
      %268 = sbr.rel (0) target = $region41
    $region40: #{tpu_custom_call.1} parent=1 // pred_region
      %270 = vsyncadd [#allocation4], 0
      %s272 = sshll.u32 [#allocation3], 4
      %s273 = int_to_ptr.vmem [resolvable:$true] %s272
      %s274 = sshll.u32 %s9, 4
      %s275 = int_to_ptr.hbm [resolvable:$true] %s274
      %277 = dma.vmem_to_hbm [thread:$0]  %s273, 16, %s275, [#allocation4]
    $region41: #{tpu_custom_call.1} parent=1 // pred_fallthru
      _
    // Predicated region
    $region42: #{tpu_custom_call.1} parent=1 // pred_check
      _
    $region43: #{tpu_custom_call.1} parent=1 // pred_check_branch
      %279 = sbr.rel (0) target = $region45
    $region44: #{tpu_custom_call.1} parent=1 // pred_region
      %281 = dma.done [#allocation4], 16
    $region45: #{tpu_custom_call.1} parent=1 // pred_fallthru
      _
    %282 = vsyncpa [#allocation4], 1

</llo_original>
